<compile_context>
chip_gen: v7x
topology: tpu7x:2x2x1
jax: 0.10.0
libtpu: 0.0.40
codegen_flags: <defaults>
</compile_context>

<pallas_src>
import functools

import jax
import jax.numpy as jnp
import numpy as np
from jax import lax
from jax.experimental import pallas as pl
from jax.experimental.pallas import tpu as pltpu

BN_EPS = 1e-5


def _round_up(x, m):
    return ((x + m - 1) // m) * m


def _pick_batch_block(B, t_inp, t_pad, D):
    """Largest divisor of B whose x-block stays modest, targeting >=256 MXU rows."""
    best = 1
    for cand in range(1, B + 1):
        if B % cand != 0:
            continue
        if cand * t_pad * D * 4 > (8 << 20):
            break
        best = cand
        if cand * t_inp >= 256:
            break
    return best


def _fused_encoder_kernel(x_ref, w_ref, gamma_ref, beta_ref, o_ref,
                          sum_sc, sq_sc, *, t_inp, past_t, bb, inv_m):
    """Causal conv (one im2col matmul) + batch stats + fused BN/ReLU epilogue.

    x_ref:     (bb, t_pad, D)   causally pre-padded input rows (no lane pad)
    w_ref:     (past_t*D, C_pad) im2col weight, channel dim zero-padded to 128x
    gamma/beta:(1, C_pad)
    o_ref:     (M, C_pad)       resident output block (holds z, then y in place)
    sum_sc/sq_sc: (1, C_pad)    resident per-channel stats accumulators
    """
    b = pl.program_id(0)
    nb = pl.num_programs(0)
    rows = bb * t_inp

    @pl.when(b == 0)
    def _():
        sum_sc[...] = jnp.zeros_like(sum_sc)
        sq_sc[...] = jnp.zeros_like(sq_sc)

    xb = x_ref[...]                                        # (bb, t_pad, D)
    d = xb.shape[-1]
    # In-kernel im2col: lane-concatenate the past_t shifted time slices so the
    # whole conv is ONE MXU matmul with K = past_t*D (x read from HBM once, no
    # duplicated patch tensor, no per-dt tiny-K matmuls).
    cols = [xb[:, dt:dt + t_inp, :].reshape(rows, d) for dt in range(past_t)]
    patches = jnp.concatenate(cols, axis=-1)               # (rows, past_t*D)
    z = jnp.dot(patches, w_ref[...],
                preferred_element_type=jnp.float32)        # (rows, C_pad) f32

    # Per-channel batch statistics, resident across the batch grid.
    sum_sc[...] += jnp.sum(z, axis=0, keepdims=True)
    sq_sc[...] += jnp.sum(z * z, axis=0, keepdims=True)

    # Stash z into the resident output block (never written back until the end).
    start = b * rows
    if rows % 8 == 0:
        start = pl.multiple_of(start, 8)
    o_ref[pl.ds(start, rows), :] = z

    # Last batch block: fold BN into a single per-channel FMA and ReLU in place.
    @pl.when(b == nb - 1)
    def _():
        mean = sum_sc[...] * inv_m
        var = jnp.maximum(sq_sc[...] * inv_m - mean * mean, 0.0)   # biased var
        s = gamma_ref[...] * lax.rsqrt(var + BN_EPS)               # EUP rsqrt
        t = beta_ref[...] - mean * s
        o_ref[...] = jnp.maximum(o_ref[...] * s + t, 0.0)


@functools.partial(jax.jit, static_argnames=("past_t", "hidden_dim"))
def encoder_forward(x, conv_w, conv_b, bn_gamma, bn_beta, *, past_t, hidden_dim):
    """x: (B, n_inp, t_inp, n_points) NCHW float32."""
    B, n_inp, t_inp, n_points = x.shape
    c_out = hidden_dim * n_points
    D = n_inp * n_points
    K = past_t * D
    M = B * t_inp
    C_pad = _round_up(c_out, 128)
    t_pad = t_inp + past_t - 1

    # Conv bias is cancelled exactly by the training-mode BatchNorm mean
    # subtraction over the full (B, T) extent; drop it (kept in the signature
    # for interface compatibility only).
    del conv_b

    # ---- glue: NCHW -> (B, t_pad, D), causal zero pre-pad; NO lane pad of D ----
    x_btd = jnp.transpose(x, (0, 2, 1, 3)).reshape(B, t_inp, D)
    x_btd = jnp.pad(x_btd, ((0, 0), (past_t - 1, 0), (0, 0)))

    # conv_w: (C_out, Cin, past_t, n_points) -> im2col weight (past_t*D, C_pad)
    w_r = jnp.transpose(conv_w, (2, 1, 3, 0)).reshape(K, c_out)
    w_r = jnp.pad(w_r, ((0, 0), (0, C_pad - c_out)))

    g_row = jnp.pad(bn_gamma, (0, C_pad - c_out)).reshape(1, C_pad)
    b_row = jnp.pad(bn_beta, (0, C_pad - c_out)).reshape(1, C_pad)

    bb = _pick_batch_block(B, t_inp, t_pad, D)
    n_blocks = B // bb

    # VMEM budget: double-buffered x block + weights + resident output + params.
    vmem_est = 4 * (2 * bb * t_pad * D + 2 * K * C_pad + M * C_pad + 6 * C_pad)
    if vmem_est > 40 * 1024 * 1024:
        # TODO(synk): for large B*t_inp*C the resident-z fused path exceeds VMEM;
        # fall back to a two-phase pipeline (conv+stats, then BN/ReLU) with a
        # C-tile grid axis sized for v7x's 64 MiB and CORE_PARALLEL per-core
        # partial statistics.
        raise NotImplementedError("resident-z fused path needs <= 40 MiB VMEM")
    vmem_limit = int(min(max(2 * vmem_est, 16 * 1024 * 1024), 48 * 1024 * 1024))

    cost = pl.CostEstimate(
        flops=2 * M * K * C_pad + 8 * M * C_pad,
        transcendentals=C_pad,
        bytes_accessed=4 * (B * t_pad * D + K * C_pad + M * C_pad + 2 * C_pad),
    )

    kernel = functools.partial(_fused_encoder_kernel, t_inp=t_inp,
                               past_t=past_t, bb=bb, inv_m=1.0 / float(M))
    y = pl.pallas_call(
        kernel,
        out_shape=jax.ShapeDtypeStruct((M, C_pad), jnp.float32),
        grid=(n_blocks,),
        in_specs=[
            pl.BlockSpec((bb, t_pad, D), lambda i: (i, 0, 0)),
            pl.BlockSpec((K, C_pad), lambda i: (0, 0)),
            pl.BlockSpec((1, C_pad), lambda i: (0, 0)),
            pl.BlockSpec((1, C_pad), lambda i: (0, 0)),
        ],
        out_specs=pl.BlockSpec((M, C_pad), lambda i: (0, 0)),
        scratch_shapes=[pltpu.VMEM((1, C_pad), jnp.float32),
                        pltpu.VMEM((1, C_pad), jnp.float32)],
        compiler_params=pltpu.CompilerParams(
            # Stats + resident output accumulate across the batch grid.
            dimension_semantics=("arbitrary",),
            vmem_limit_bytes=vmem_limit),
        cost_estimate=cost,
    )(x_btd, w_r, g_row, b_row)

    # ---- glue: drop channel padding, back to PyTorch NCHW + .view(...) ----
    y = y[:, :c_out]
    out_nchw = jnp.transpose(y.reshape(B, t_inp, c_out), (0, 2, 1))[..., None]
    return out_nchw.reshape(-1, hidden_dim, t_inp, n_points)


def _reference_forward(x, conv_w, conv_b, bn_gamma, bn_beta, *, past_t, hidden_dim):
    """Pure-JAX reference (same math as the PyTorch module, no Pallas)."""
    B, n_inp, t_inp, n_points = x.shape
    c_out = hidden_dim * n_points
    xp = jnp.pad(x, ((0, 0), (0, 0), (past_t - 1, 0), (0, 0)))
    z = lax.conv_general_dilated(
        xp, conv_w, window_strides=(1, 1), padding="VALID",
        dimension_numbers=("NCHW", "OIHW", "NCHW"),
    ) + conv_b.reshape(1, c_out, 1, 1)
    mu = jnp.mean(z, axis=(0, 2, 3), keepdims=True)
    var = jnp.mean((z - mu) ** 2, axis=(0, 2, 3), keepdims=True)
    zn = (z - mu) / jnp.sqrt(var + BN_EPS)
    y = zn * bn_gamma.reshape(1, c_out, 1, 1) + bn_beta.reshape(1, c_out, 1, 1)
    y = jnp.maximum(y, 0.0)
    return y.reshape(-1, hidden_dim, t_inp, n_points)


if __name__ == "__main__":
    # Small shapes consistent with the module.
    B, n_inp, t_inp, n_points = 2, 4, 8, 4
    past_t, hidden_dim = 3, 8
    c_out = hidden_dim * n_points            # 32
    fan_in = n_inp * past_t * n_points       # 48

    key = jax.random.PRNGKey(0)
    kx, kw, kb = jax.random.split(key, 3)

    x = jax.random.normal(kx, (B, n_inp, t_inp, n_points), dtype=jnp.float32)

    bound = 1.0 / np.sqrt(fan_in)            # PyTorch Conv2d default init bound
    conv_w = jax.random.uniform(kw, (c_out, n_inp, past_t, n_points),
                                minval=-bound, maxval=bound, dtype=jnp.float32)
    conv_b = jax.random.uniform(kb, (c_out,), minval=-bound, maxval=bound,
                                dtype=jnp.float32)
    bn_gamma = jnp.ones((c_out,), dtype=jnp.float32)   # PyTorch BatchNorm2d defaults
    bn_beta = jnp.zeros((c_out,), dtype=jnp.float32)

    out = encoder_forward(x, conv_w, conv_b, bn_gamma, bn_beta,
                          past_t=past_t, hidden_dim=hidden_dim)
    out = jax.block_until_ready(out)

    ref = _reference_forward(x, conv_w, conv_b, bn_gamma, bn_beta,
                             past_t=past_t, hidden_dim=hidden_dim)
    ref = jax.block_until_ready(ref)

    assert out.shape == (B, hidden_dim, t_inp, n_points), out.shape
    np.testing.assert_allclose(np.asarray(out), np.asarray(ref), rtol=2e-4, atol=2e-4)

    print("KERNEL_OK")
</pallas_src>

<mosaic_0001>
module attributes {stable_mosaic.version = 11 : i64} {
  func.func @_fused_encoder_kernel(%arg0: i32, %arg1: memref<2x10x16xf32, #tpu.memory_space<vmem>>, %arg2: memref<48x128xf32, #tpu.memory_space<vmem>>, %arg3: memref<1x128xf32, #tpu.memory_space<vmem>>, %arg4: memref<1x128xf32, #tpu.memory_space<vmem>>, %arg5: memref<16x128xf32, #tpu.memory_space<vmem>>, %arg6: memref<1x128xf32, #tpu.memory_space<vmem>>, %arg7: memref<1x128xf32, #tpu.memory_space<vmem>>) attributes {dimension_semantics = [#tpu.dimension_semantics<arbitrary>], iteration_bounds = array<i64: 1>, scalar_prefetch = 0 : i64, scratch_operands = 2 : i64, tpu.core_type = #tpu.core_type<tc>, window_params = [{transform_indices = @transform_0, window_bounds = array<i64: 2, 10, 16>}, {pipeline_mode = #tpu.pipeline_mode<synchronous>, transform_indices = @transform_1, window_bounds = array<i64: 48, 128>}, {pipeline_mode = #tpu.pipeline_mode<synchronous>, transform_indices = @transform_2, window_bounds = array<i64: 1, 128>}, {pipeline_mode = #tpu.pipeline_mode<synchronous>, transform_indices = @transform_3, window_bounds = array<i64: 1, 128>}, {pipeline_mode = #tpu.pipeline_mode<synchronous>, transform_indices = @transform_4, window_bounds = array<i64: 16, 128>}]} {
    %c0_i32 = arith.constant 0 : i32
    %0 = arith.cmpi eq, %arg0, %c0_i32 : i32
    %1 = arith.extui %0 : i1 to i32
    %c0_i32_0 = arith.constant 0 : i32
    %2 = arith.cmpi ne, %1, %c0_i32_0 : i32
    scf.if %2 {
      %cst_18 = arith.constant 0.000000e+00 : f32
      %31 = vector.broadcast %cst_18 : f32 to vector<1x128xf32>
      %c0_19 = arith.constant 0 : index
      %c0_20 = arith.constant 0 : index
      %32 = vector.load %arg6[%c0_19, %c0_20] : memref<1x128xf32, #tpu.memory_space<vmem>>, vector<1x128xf32>
      tpu.vector_store %arg6[%c0_19, %c0_20], %31 {strides = array<i32>} : memref<1x128xf32, #tpu.memory_space<vmem>>, vector<1x128xf32>,
      %cst_21 = arith.constant 0.000000e+00 : f32
      %33 = vector.broadcast %cst_21 : f32 to vector<1x128xf32>
      %c0_22 = arith.constant 0 : index
      %c0_23 = arith.constant 0 : index
      %34 = vector.load %arg7[%c0_22, %c0_23] : memref<1x128xf32, #tpu.memory_space<vmem>>, vector<1x128xf32>
      tpu.vector_store %arg7[%c0_22, %c0_23], %33 {strides = array<i32>} : memref<1x128xf32, #tpu.memory_space<vmem>>, vector<1x128xf32>,
    } else {
    }
    %c0 = arith.constant 0 : index
    %c0_1 = arith.constant 0 : index
    %c0_2 = arith.constant 0 : index
    %3 = vector.load %arg1[%c0, %c0_1, %c0_2] : memref<2x10x16xf32, #tpu.memory_space<vmem>>, vector<2x10x16xf32>
    %4 = vector.extract_strided_slice %3 {offsets = [0, 0, 0], sizes = [2, 8, 16], strides = [1, 1, 1]} : vector<2x10x16xf32> to vector<2x8x16xf32>
    %5 = vector.shape_cast %4 : vector<2x8x16xf32> to vector<16x16xf32>
    %6 = vector.extract_strided_slice %3 {offsets = [0, 1, 0], sizes = [2, 8, 16], strides = [1, 1, 1]} : vector<2x10x16xf32> to vector<2x8x16xf32>
    %7 = vector.shape_cast %6 : vector<2x8x16xf32> to vector<16x16xf32>
    %8 = vector.extract_strided_slice %3 {offsets = [0, 2, 0], sizes = [2, 8, 16], strides = [1, 1, 1]} : vector<2x10x16xf32> to vector<2x8x16xf32>
    %9 = vector.shape_cast %8 : vector<2x8x16xf32> to vector<16x16xf32>
    %10 = tpu.concatenate %5, %7, %9 in 1 : vector<16x16xf32>, vector<16x16xf32>, vector<16x16xf32> -> vector<16x48xf32>
    %c0_3 = arith.constant 0 : index
    %c0_4 = arith.constant 0 : index
    %11 = vector.load %arg2[%c0_3, %c0_4] : memref<48x128xf32, #tpu.memory_space<vmem>>, vector<48x128xf32>
    %cst = arith.constant dense<0.000000e+00> : vector<16x128xf32>
    %12 = tpu.matmul %10, %11, %cst {dimension_numbers = #tpu.dot_dimension_numbers<[1], [0], [0], [1], [0, 0, 1, 1], [], []>} : vector<16x48xf32>, vector<48x128xf32>, vector<16x128xf32> -> vector<16x128xf32>
    %c0_5 = arith.constant 0 : index
    %c0_6 = arith.constant 0 : index
    %13 = vector.load %arg6[%c0_5, %c0_6] : memref<1x128xf32, #tpu.memory_space<vmem>>, vector<1x128xf32>
    %cst_7 = arith.constant dense<0.000000e+00> : vector<128xf32>
    %14 = vector.multi_reduction <add>, %12, %cst_7 [0] : vector<16x128xf32> to vector<128xf32>
    %15 = vector.shape_cast %14 : vector<128xf32> to vector<1x128xf32>
    %16 = arith.addf %13, %15 : vector<1x128xf32>
    %c0_8 = arith.constant 0 : index
    %c0_9 = arith.constant 0 : index
    %17 = vector.load %arg6[%c0_8, %c0_9] : memref<1x128xf32, #tpu.memory_space<vmem>>, vector<1x128xf32>
    tpu.vector_store %arg6[%c0_8, %c0_9], %16 {strides = array<i32>} : memref<1x128xf32, #tpu.memory_space<vmem>>, vector<1x128xf32>,
    %c0_10 = arith.constant 0 : index
    %c0_11 = arith.constant 0 : index
    %18 = vector.load %arg7[%c0_10, %c0_11] : memref<1x128xf32, #tpu.memory_space<vmem>>, vector<1x128xf32>
    %19 = arith.mulf %12, %12 : vector<16x128xf32>
    %cst_12 = arith.constant dense<0.000000e+00> : vector<128xf32>
    %20 = vector.multi_reduction <add>, %19, %cst_12 [0] : vector<16x128xf32> to vector<128xf32>
    %21 = vector.shape_cast %20 : vector<128xf32> to vector<1x128xf32>
    %22 = arith.addf %18, %21 : vector<1x128xf32>
    %c0_13 = arith.constant 0 : index
    %c0_14 = arith.constant 0 : index
    %23 = vector.load %arg7[%c0_13, %c0_14] : memref<1x128xf32, #tpu.memory_space<vmem>>, vector<1x128xf32>
    tpu.vector_store %arg7[%c0_13, %c0_14], %22 {strides = array<i32>} : memref<1x128xf32, #tpu.memory_space<vmem>>, vector<1x128xf32>,
    %c16_i32 = arith.constant 16 : i32
    %24 = arith.muli %arg0, %c16_i32 : i32
    %25 = tpu.assume_multiple %24, 8 : i32
    %26 = arith.index_cast %25 : i32 to index
    %c0_15 = arith.constant 0 : index
    %27 = vector.load %arg5[%26, %c0_15] : memref<16x128xf32, #tpu.memory_space<vmem>>, vector<16x128xf32>
    tpu.vector_store %arg5[%26, %c0_15], %12 {strides = array<i32>} : memref<16x128xf32, #tpu.memory_space<vmem>>, vector<16x128xf32>,
    %c0_i32_16 = arith.constant 0 : i32
    %28 = arith.cmpi eq, %arg0, %c0_i32_16 : i32
    %29 = arith.extui %28 : i1 to i32
    %c0_i32_17 = arith.constant 0 : i32
    %30 = arith.cmpi ne, %29, %c0_i32_17 : i32
    scf.if %30 {
      %c0_18 = arith.constant 0 : index
      %c0_19 = arith.constant 0 : index
      %31 = vector.load %arg6[%c0_18, %c0_19] : memref<1x128xf32, #tpu.memory_space<vmem>>, vector<1x128xf32>
      %cst_20 = arith.constant 6.250000e-02 : f32
      %32 = vector.broadcast %cst_20 : f32 to vector<1x128xf32>
      %33 = arith.mulf %31, %32 : vector<1x128xf32>
      %c0_21 = arith.constant 0 : index
      %c0_22 = arith.constant 0 : index
      %34 = vector.load %arg7[%c0_21, %c0_22] : memref<1x128xf32, #tpu.memory_space<vmem>>, vector<1x128xf32>
      %cst_23 = arith.constant 6.250000e-02 : f32
      %35 = vector.broadcast %cst_23 : f32 to vector<1x128xf32>
      %36 = arith.mulf %34, %35 : vector<1x128xf32>
      %37 = arith.mulf %33, %33 : vector<1x128xf32>
      %38 = arith.subf %36, %37 : vector<1x128xf32>
      %cst_24 = arith.constant 0.000000e+00 : f32
      %39 = vector.broadcast %cst_24 : f32 to vector<1x128xf32>
      %40 = arith.maximumf %38, %39 : vector<1x128xf32>
      %c0_25 = arith.constant 0 : index
      %c0_26 = arith.constant 0 : index
      %41 = vector.load %arg3[%c0_25, %c0_26] : memref<1x128xf32, #tpu.memory_space<vmem>>, vector<1x128xf32>
      %cst_27 = arith.constant 9.99999974E-6 : f32
      %42 = vector.broadcast %cst_27 : f32 to vector<1x128xf32>
      %43 = arith.addf %40, %42 : vector<1x128xf32>
      %44 = math.rsqrt %43 : vector<1x128xf32>
      %45 = arith.mulf %41, %44 : vector<1x128xf32>
      %c0_28 = arith.constant 0 : index
      %c0_29 = arith.constant 0 : index
      %46 = vector.load %arg4[%c0_28, %c0_29] : memref<1x128xf32, #tpu.memory_space<vmem>>, vector<1x128xf32>
      %47 = arith.mulf %33, %45 : vector<1x128xf32>
      %48 = arith.subf %46, %47 : vector<1x128xf32>
      %c0_30 = arith.constant 0 : index
      %c0_31 = arith.constant 0 : index
      %49 = vector.load %arg5[%c0_30, %c0_31] : memref<16x128xf32, #tpu.memory_space<vmem>>, vector<16x128xf32>
      %50 = vector.broadcast %45 : vector<1x128xf32> to vector<16x128xf32>
      %51 = arith.mulf %49, %50 : vector<16x128xf32>
      %52 = vector.broadcast %48 : vector<1x128xf32> to vector<16x128xf32>
      %53 = arith.addf %51, %52 : vector<16x128xf32>
      %cst_32 = arith.constant 0.000000e+00 : f32
      %54 = vector.broadcast %cst_32 : f32 to vector<16x128xf32>
      %55 = arith.maximumf %53, %54 : vector<16x128xf32>
      %c0_33 = arith.constant 0 : index
      %c0_34 = arith.constant 0 : index
      %56 = vector.load %arg5[%c0_33, %c0_34] : memref<16x128xf32, #tpu.memory_space<vmem>>, vector<16x128xf32>
      tpu.vector_store %arg5[%c0_33, %c0_34], %55 {strides = array<i32>} : memref<16x128xf32, #tpu.memory_space<vmem>>, vector<16x128xf32>,
    } else {
    }
    return
  }
  func.func @transform_0(%arg0: i32) -> (i32, i32, i32) {
    %c0_i32 = arith.constant 0 : i32
    %c0_i32_0 = arith.constant 0 : i32
    %c0_i32_1 = arith.constant 0 : i32
    return %arg0, %c0_i32, %c0_i32_0 : i32, i32, i32
  }
  func.func @transform_1(%arg0: i32) -> (i32, i32) {
    %c0_i32 = arith.constant 0 : i32
    %c0_i32_0 = arith.constant 0 : i32
    %c0_i32_1 = arith.constant 0 : i32
    return %c0_i32, %c0_i32_0 : i32, i32
  }
  func.func @transform_2(%arg0: i32) -> (i32, i32) {
    %c0_i32 = arith.constant 0 : i32
    %c0_i32_0 = arith.constant 0 : i32
    %c0_i32_1 = arith.constant 0 : i32
    return %c0_i32, %c0_i32_0 : i32, i32
  }
  func.func @transform_3(%arg0: i32) -> (i32, i32) {
    %c0_i32 = arith.constant 0 : i32
    %c0_i32_0 = arith.constant 0 : i32
    %c0_i32_1 = arith.constant 0 : i32
    return %c0_i32, %c0_i32_0 : i32, i32
  }
  func.func @transform_4(%arg0: i32) -> (i32, i32) {
    %c0_i32 = arith.constant 0 : i32
    %c0_i32_0 = arith.constant 0 : i32
    %c0_i32_1 = arith.constant 0 : i32
    return %c0_i32, %c0_i32_0 : i32, i32
  }
}

</mosaic_0001>

<llo_original>
// kernel: encoder_forward.1
$region0: #{encoder_forward.1}
  #allocation0 [shape = 'u32[]', space=smem, size = 0x4, offset = 0x4, fixed_abs, tag = 'smem constant byte address 0x4 - core index']
  #allocation1 [shape = 'u32[144,128]{1,0:T(1,128)}', space=vmem, size = 0x12000, scoped, tag = 'internal scratch']
  #allocation2 [shape = 'f32[1,128]{1,0:T(1,128)}', space=vmem, size = 0x200, scoped, tag = 'scratch operand']
  #allocation3 [shape = 'f32[1,128]{1,0:T(1,128)}', space=vmem, size = 0x200, scoped, tag = 'scratch operand']
  %s0 = inlined_call_operand.vmem [shape: f32[2,10,16], index: 0, kind: input, shape index: {}]
  %s1 = inlined_call_operand.vmem [shape: f32[48,128], index: 1, kind: input, shape index: {}]
  %s2 = inlined_call_operand.vmem [shape: f32[1,128], index: 2, kind: input, shape index: {}]
  %s3 = inlined_call_operand.vmem [shape: f32[1,128], index: 3, kind: input, shape index: {}]
  %s4 = inlined_call_operand.vmem [shape: f32[16,128], index: 4, kind: output, shape index: {}]
  %s5 = sld [smem:[#allocation0]]
  $region34: #{encoder_forward.1} parent=0
    _
  %s7 = ssub.s32 1, %s5
  %s8 = scalar_select 0, %s7, %s5
  // Predicated region
  $region2: #{encoder_forward.1} parent=0 // pred_check
    _
  $region3: #{encoder_forward.1} parent=0 // pred_check_branch
    %10 = sbr.rel (0) target = $region5
  $region4: #{encoder_forward.1} parent=0 // pred_region
    _
  $region5: #{encoder_forward.1} parent=0 // pred_fallthru
    _
  // Predicated region
  $region6: #{encoder_forward.1} parent=0 // pred_check
    _
  $region7: #{encoder_forward.1} parent=0 // pred_check_branch
    %12 = sbr.rel (0) target = $region9
  $region8: #{encoder_forward.1} parent=0 // pred_region
    _
  $region9: #{encoder_forward.1} parent=0 // pred_fallthru
    _
  // Predicated region
  $region10: #{encoder_forward.1} parent=0 // pred_check
    _
  $region11: #{encoder_forward.1} parent=0 // pred_check_branch
    %14 = sbr.rel (0) target = $region13
  $region12: #{encoder_forward.1} parent=0 // pred_region
    _
  $region13: #{encoder_forward.1} parent=0 // pred_fallthru
    _
  // Predicated region
  $region14: #{encoder_forward.1} parent=0 // pred_check
    _
  $region15: #{encoder_forward.1} parent=0 // pred_check_branch
    %16 = sbr.rel (0) target = $region17
  $region16: #{encoder_forward.1} parent=0 // pred_region
    _
  $region17: #{encoder_forward.1} parent=0 // pred_fallthru
    _
  %p17 = scmp.eq.s32.totalorder 0, 0
  // Predicated region
  $region18: #{encoder_forward.1} parent=0 // pred_check
    %p18 = pneg %p17
  $region19: #{encoder_forward.1} parent=0 // pred_check_branch
    %20 = sbr.rel (%p18) target = $region21
  $region20: #{encoder_forward.1} parent=0 // pred_region
    %21 = vst [vmem:[#allocation2] sm:$0x1] 0.0
    %22 = vst [vmem:[#allocation3] sm:$0x1] 0.0
  $region21: #{encoder_forward.1} parent=0 // pred_fallthru
    _
  %v23 = vld [vmem:[%s0] sm:$0xff]
  %v24 = vld [vmem:[%s0 + $0x8] sm:$0x3]
  %v25 = vld [vmem:[%s0 + $0x10] sm:$0xff]
  %v26 = vld [vmem:[%s0 + $0x18] sm:$0x3]
  %vm31 = vcmask 1046528
  %v32 = vrot.slane %v23, 1
  %v33 = vrot.slane %v24, 1
  %v34 = vsel %vm31, %v32, %v33
  %v35 = vrot.slane %v25, 1
  %v36 = vrot.slane %v26, 1
  %v37 = vsel %vm31, %v35, %v36
  %vm38 = vcmask 1045504
  %v39 = vrot.slane %v23, 2
  %v40 = vrot.slane %v24, 2
  %v41 = vsel %vm38, %v39, %v40
  %v42 = vrot.slane %v25, 2
  %v43 = vrot.slane %v26, 2
  %v44 = vsel %vm38, %v42, %v43
  %45 = vrot.lane.b32.xlu0 %v34, 16
  %v46 = vpop.permute.xlu0 %45
  %47 = vrot.lane.b32.xlu0 %v37, 16
  %v48 = vpop.permute.xlu0 %47
  %51 = vrot.lane.b32.xlu0 %v41, 32
  %v52 = vpop.permute.xlu0 %51
  %53 = vrot.lane.b32.xlu0 %v44, 32
  %v54 = vpop.permute.xlu0 %53
  %vm57 = vcmask 130048
  %v58 = vsel %vm57, %v23, %v46
  %v59 = vsel %vm57, %v25, %v48
  %vm60 = vcmask 261120
  %v61 = vsel %vm60, %v58, %v52
  %v62 = vsel %vm60, %v59, %v54
  %v63 = vld [vmem:[%s1] sm:$0xff]
  %v64 = vld [vmem:[%s1 + $0x8] sm:$0xff]
  %v65 = vld [vmem:[%s1 + $0x10] sm:$0xff]
  %v66 = vld [vmem:[%s1 + $0x18] sm:$0xff]
  %v67 = vld [vmem:[%s1 + $0x20] sm:$0xff]
  %v68 = vld [vmem:[%s1 + $0x28] sm:$0xff]
  %vm69 = vcmask 392192
  %v71 = vsel %vm69, %v61, 0
  %v74 = vsel %vm69, %v62, 0
  %76 = vmatprep.subr.mxu0 0.0
  %77 = vmatpush1.msra.mxu0 %v63
  %78 = vmatprep.subr.mxu0 0.0
  %79 = vmatpush1.msra.mxu0 %v64
  %80 = vmatprep.subr.mxu0 0.0
  %81 = vmatpush1.msra.mxu0 %v65
  %82 = vmatprep.subr.mxu0 0.0
  %83 = vmatpush1.msra.mxu0 %v66
  %84 = vmatprep.subr.mxu0 0.0
  %85 = vmatpush1.msra.mxu0 %v67
  %86 = vmatprep.subr.mxu0 0.0
  %87 = vmatpush1.msra.mxu0 %v68
  %88 = vmatprep.subr.mxu0 0.0
  %89 = vmatpush1.msra.mxu0 0.0
  %90 = vmatprep.subr.mxu0 0.0
  %91 = vmatpush1.msra.mxu0 0.0
  %92 = vmatprep.subr.mxu0 0.0
  %93 = vmatpush1.msra.mxu0 0.0
  %94 = vmatprep.subr.mxu0 0.0
  %95 = vmatpush1.msra.mxu0 0.0
  %96 = vmatprep.subr.mxu0 0.0
  %97 = vmatpush1.msra.mxu0 0.0
  %98 = vmatprep.subr.mxu0 0.0
  %99 = vmatpush1.msra.mxu0 0.0
  %100 = vmatprep.subr.mxu0 0.0
  %101 = vmatpush1.msra.mxu0 0.0
  %102 = vmatprep.subr.mxu0 0.0
  %103 = vmatpush1.msra.mxu0 0.0
  %104 = vmatprep.subr.mxu0 0.0
  %105 = vmatpush1.msra.mxu0 0.0
  %106 = vmatprep.subr.mxu0 0.0
  %107 = vmatpush1.msra.mxu0 0.0
  %108 = vmatprep.subr.mxu0 0.0
  %109 = vmatpush1.msra.mxu0 0.0
  %110 = vmatprep.subr.mxu0 0.0
  %111 = vmatpush1.msra.mxu0 0.0
  %112 = vmatprep.subr.mxu0 0.0
  %113 = vmatpush1.msra.mxu0 0.0
  %114 = vmatprep.subr.mxu0 0.0
  %115 = vmatpush1.msra.mxu0 0.0
  %116 = vmatprep.subr.mxu0 0.0
  %117 = vmatpush1.msra.mxu0 0.0
  %118 = vmatprep.subr.mxu0 0.0
  %119 = vmatpush1.msra.mxu0 0.0
  %120 = vmatprep.subr.mxu0 0.0
  %121 = vmatpush1.msra.mxu0 0.0
  %122 = vmatprep.subr.mxu0 0.0
  %123 = vmatpush1.msra.mxu0 0.0
  %124 = vmatprep.subr.mxu0 0.0
  %125 = vmatpush1.msra.mxu0 0.0
  %126 = vmatprep.subr.mxu0 0.0
  %127 = vmatpush1.msra.mxu0 0.0
  %128 = vmatprep.subr.mxu0 0.0
  %129 = vmatpush1.msra.mxu0 0.0
  %130 = vmatprep.subr.mxu0 0.0
  %131 = vmatpush1.msra.mxu0 0.0
  %132 = vmatprep.subr.mxu0 0.0
  %133 = vmatpush1.msra.mxu0 0.0
  %134 = vmatprep.subr.mxu0 0.0
  %135 = vmatpush1.msra.mxu0 0.0
  %136 = vmatprep.subr.mxu0 0.0
  %137 = vmatpush1.msra.mxu0 0.0
  %138 = vmatprep.subr.mxu0 0.0
  %139 = vmatpush1.msra.mxu0 0.0
  %140 = vmatprep.mubr.f32.mxu0 0.0
  %141 = vmatmul.mubr.f32.gmra.mrb[0].mxu0 %v71
  %v142 = vpop.f32.mrb[0].mxu0
  %v143 = vadd.f32 0.0, %v142
  %v144 = vpop.f32.mrb[0].mxu0
  %145 = vmatprep.mubr.f32.mxu0 0.0
  %146 = vmatmul.mubr.f32.gmra.mrb[0].mxu0 %v74
  %v147 = vpop.f32.mrb[0].mxu0
  %v148 = vadd.f32 0.0, %v147
  %v149 = vpop.f32.mrb[0].mxu0
  %150 = vdwg.mxu0
  %v151 = vld [vmem:[#allocation2] sm:$0x1]
  %v152 = vadd.f32 %v143, %v148
  %v153 = vrot.slane %v152, 4
  %v154 = vadd.f32 %v152, %v153
  %v155 = vrot.slane %v154, 2
  %v156 = vadd.f32 %v154, %v155
  %v157 = vrot.slane %v156, 1
  %v158 = vadd.f32 %v156, %v157
  %v159 = vadd.f32 %v151, %v158
  %160 = vst [vmem:[#allocation2] sm:$0x1] %v159
  %v161 = vld [vmem:[#allocation3] sm:$0x1]
  %v162 = vmul.f32 %v143, %v143
  %v163 = vmul.f32 %v148, %v148
  %v164 = vadd.f32 %v162, %v163
  %v165 = vrot.slane %v164, 4
  %v166 = vadd.f32 %v164, %v165
  %v167 = vrot.slane %v166, 2
  %v168 = vadd.f32 %v166, %v167
  %v169 = vrot.slane %v168, 1
  %v170 = vadd.f32 %v168, %v169
  %v171 = vadd.f32 %v161, %v170
  %172 = vst [vmem:[#allocation3] sm:$0x1] %v171
  %s173 = smul.u32 0, 16
  %s174 = scalar_lea.vmem %s4, %s173
  %175 = vst [vmem:[%s174] sm:$0xff] %v143
  %176 = vst [vmem:[%s174 + $0x8] sm:$0xff] %v148
  // Predicated region
  $region22: #{encoder_forward.1} parent=0 // pred_check
    %p177 = pneg %p17
  $region23: #{encoder_forward.1} parent=0 // pred_check_branch
    %179 = sbr.rel (%p177) target = $region25
  $region24: #{encoder_forward.1} parent=0 // pred_region
    %v180 = vld [vmem:[#allocation2] sm:$0x1]
    %v181 = vmul.f32 %v180, 0.0625
    %v182 = vld [vmem:[#allocation3] sm:$0x1]
    %v183 = vmul.f32 %v182, 0.0625
    %v184 = vmul.f32 %v181, %v181
    %v185 = vsub.f32 %v183, %v184
    %v186 = vmax.f32 %v185, 0.0
    %v187 = vld [vmem:[%s2] sm:$0x1]
    %v188 = vadd.f32 %v186, 1e-05
    %v189 = vrsqrt.pop %v188
    %v190 = vmul.f32 %v187, %v189
    %v191 = vld [vmem:[%s3] sm:$0x1]
    %v192 = vmul.f32 %v181, %v190
    %v193 = vsub.f32 %v191, %v192
    %v194 = vld [vmem:[%s4] sm:$0xff]
    %v195 = vld [vmem:[%s4 + $0x8] sm:$0xff]
    %v197 = vlaneseq
    %v198 = vshrl.u32 %v197, 7
    %v199 = vsub.s32 0, %v198
    %v200 = vrot.slane %v190, %v199
    %v202 = vmul.f32 %v194, %v200
    %v203 = vmul.f32 %v195, %v200
    %v205 = vlaneseq
    %v206 = vshrl.u32 %v205, 7
    %v207 = vsub.s32 0, %v206
    %v208 = vrot.slane %v193, %v207
    %v210 = vadd.f32 %v202, %v208
    %v211 = vadd.f32 %v203, %v208
    %v212 = vmax.f32 %v210, 0.0
    %v213 = vmax.f32 %v211, 0.0
    %214 = vst [vmem:[%s4] sm:$0xff] %v212
    %215 = vst [vmem:[%s4 + $0x8] sm:$0xff] %v213
  $region25: #{encoder_forward.1} parent=0 // pred_fallthru
    _
  // Predicated region
  $region26: #{encoder_forward.1} parent=0 // pred_check
    _
  $region27: #{encoder_forward.1} parent=0 // pred_check_branch
    %217 = sbr.rel (0) target = $region29
  $region28: #{encoder_forward.1} parent=0 // pred_region
    _
  $region29: #{encoder_forward.1} parent=0 // pred_fallthru
    _
  // Predicated region
  $region30: #{encoder_forward.1} parent=0 // pred_check
    _
  $region31: #{encoder_forward.1} parent=0 // pred_check_branch
    %219 = sbr.rel (0) target = $region33
  $region32: #{encoder_forward.1} parent=0 // pred_region
    _
  $region33: #{encoder_forward.1} parent=0 // pred_fallthru
    _

</llo_original>
